<compile_context>
chip_gen: v7x
topology: tpu7x:2x2x1
jax: 0.10.0
libtpu: 0.0.40
codegen_flags: <defaults>
</compile_context>

<pallas_src>
import math

import jax
import jax.numpy as jnp
from jax import lax
from jax.experimental import pallas as pl
from jax.experimental.pallas import tpu as pltpu

# Hyper-parameters implied by the module (args.embed_dim / args.num_hops / len(vocab))
V = 32          # vocab size
D = 32          # embed_dim
NUM_HOPS = 3    # num_hops
B = 2           # batch
S = 8           # sentences per story
L = 6           # words per sentence
Q = 5           # query length

LMAX = max(L, Q)        # common padded token-row length (pad id = -1, never counted)
R = B * S + B           # rows in the stacked counts matrix: story sentences then queries


def emn_kernel(ids_ref, emb_ref, w_ref, bias_ref, out_ref):
    """Single invocation — whole batch.

    ids_ref:  (R, LMAX) int32 token ids; -1 marks padding slots.
              rows [0, B*S)   : story sentence (b, s) at row b*S + s
              rows [B*S, R)   : query of batch b at row B*S + b
    emb_ref:  (V, 3*D) f32, concatenation [embA | embB | embC]
    w_ref:    (V, D)   f32, LinW weight in PyTorch layout (out_features, in_features)
    bias_ref: (1, V)   f32, LinW bias
    out_ref:  (B, V)   f32 logits
    """
    ids = ids_ref[...]                                            # (R, LMAX)

    # Fused bag-of-words: counts[r, v] = #occurrences of token v in row r.
    lane = lax.broadcasted_iota(jnp.int32, (R, V), 1)
    counts = jnp.zeros((R, V), jnp.float32)
    for l in range(LMAX):
        counts += (lane == ids[:, l:l + 1]).astype(jnp.float32)   # pad (-1) never matches

    # One MXU pass over all three embedding tables.
    emb = jnp.dot(counts, emb_ref[...],
                  preferred_element_type=jnp.float32)             # (R, 3D)

    a3 = emb[:B * S, 0 * D:1 * D].reshape(B, S, D)                # story @ embA  -> memories
    c3 = emb[:B * S, 2 * D:3 * D].reshape(B, S, D)                # story @ embC  -> read values
    u = emb[B * S:, 1 * D:2 * D].reshape(B, 1, D)                 # query @ embB  -> state u

    for _ in range(NUM_HOPS):
        # ip = <u, a>, softmax over sentences, o = p @ c, residual update.
        ip = jnp.einsum('bqd,bsd->bqs', u, a3,
                        preferred_element_type=jnp.float32)       # (B, 1, S)
        m = jnp.max(ip, axis=-1, keepdims=True)
        e = jnp.exp(ip - m)
        p = e * pl.reciprocal(jnp.sum(e, axis=-1, keepdims=True), approx=True)
        o = jnp.einsum('bqs,bsd->bqd', p, c3,
                       preferred_element_type=jnp.float32)        # (B, 1, D)
        u = o + u

    # a = LinW(u): contract D against the (V, D) weight — no transpose needed.
    u2 = u.reshape(B, D)
    logits = lax.dot_general(u2, w_ref[...],
                             dimension_numbers=(((1,), (1,)), ((), ())),
                             preferred_element_type=jnp.float32)  # (B, V)
    out_ref[...] = logits + bias_ref[...]


@jax.jit
def emn_forward(story, query, emb_cat, linW_w, linW_b_row):
    # Only tiny int32 index plumbing happens outside the kernel: pack story
    # sentences and queries into one (R, LMAX) id block (pad id = -1).
    st = story.reshape(B * S, L)
    st = jnp.pad(st, ((0, 0), (0, LMAX - L)), constant_values=-1)
    qr = jnp.pad(query, ((0, 0), (0, LMAX - Q)), constant_values=-1)
    ids_all = jnp.concatenate([st, qr], axis=0).astype(jnp.int32)  # (R, LMAX)

    return pl.pallas_call(
        emn_kernel,
        out_shape=jax.ShapeDtypeStruct((B, V), jnp.float32),
        in_specs=[
            pl.BlockSpec(memory_space=pltpu.MemorySpace.VMEM),   # token ids
            pl.BlockSpec(memory_space=pltpu.MemorySpace.VMEM),   # [embA|embB|embC]
            pl.BlockSpec(memory_space=pltpu.MemorySpace.VMEM),   # LinW weight (V, D)
            pl.BlockSpec(memory_space=pltpu.MemorySpace.VMEM),   # LinW bias (1, V)
        ],
        out_specs=pl.BlockSpec(memory_space=pltpu.MemorySpace.VMEM),
    )(ids_all, emb_cat, linW_w, linW_b_row)


def emn_reference(story, query, embA, embB, embC, linW_w, linW_b):
    """Pure-JAX transcription of the PyTorch forward, for verification."""
    u = embB[query].sum(axis=1)                 # (B, D)
    a = embA[story].sum(axis=2)                 # (B, S, D)
    c = embC[story].sum(axis=2)                 # (B, S, D)
    for _ in range(NUM_HOPS):
        ip = jnp.einsum('bsd,bd->bs', a, u)
        p = jax.nn.softmax(ip, axis=-1)
        o = jnp.einsum('bs,bsd->bd', p, c)
        u = o + u
    return u @ linW_w.T + linW_b


if __name__ == "__main__":
    key = jax.random.PRNGKey(0)
    k1, k2, k3, k4, k5, k6, k7 = jax.random.split(key, 7)

    # Deterministic parameter init matching the module's __init__:
    #   embedA/B/C.weight ~ N(0, 0.1), LinW.weight ~ N(0.25, 0.25),
    #   LinW.bias ~ U(-1/sqrt(D), 1/sqrt(D))  (nn.Linear default).
    embA = 0.1 * jax.random.normal(k1, (V, D), dtype=jnp.float32)
    embB = 0.1 * jax.random.normal(k2, (V, D), dtype=jnp.float32)
    embC = 0.1 * jax.random.normal(k3, (V, D), dtype=jnp.float32)
    linW_w = 0.25 + 0.25 * jax.random.normal(k4, (V, D), dtype=jnp.float32)
    bound = 1.0 / math.sqrt(D)
    linW_b = jax.random.uniform(k5, (V,), jnp.float32, -bound, bound)

    # One-time parameter prep (not per-call): fused embedding table and bias row.
    emb_cat = jnp.concatenate([embA, embB, embC], axis=1)   # (V, 3D)
    bias_row = linW_b.reshape(1, V)

    # Deterministic example inputs (token ids; 0 acts as the "padding" id).
    story = jax.random.randint(k6, (B, S, L), 0, V, dtype=jnp.int32)
    query = jax.random.randint(k7, (B, Q), 0, V, dtype=jnp.int32)

    out = emn_forward(story, query, emb_cat, linW_w, bias_row)
    out = jax.block_until_ready(out)

    ref = emn_reference(story, query, embA, embB, embC, linW_w, linW_b)
    assert out.shape == (B, V)
    max_diff = float(jnp.max(jnp.abs(out - ref)))
    # Tolerance allows for the EUP approximate reciprocal in the hop softmax.
    assert jnp.allclose(out, ref, rtol=1e-2, atol=1e-2), f"max abs diff {max_diff}"

    print("KERNEL_OK")
</pallas_src>

<mosaic_0001>
module attributes {stable_mosaic.version = 11 : i64} {
  func.func @emn_kernel(%arg0: memref<18x6xi32, #tpu.memory_space<vmem>>, %arg1: memref<32x96xf32, #tpu.memory_space<vmem>>, %arg2: memref<32x32xf32, #tpu.memory_space<vmem>>, %arg3: memref<1x32xf32, #tpu.memory_space<vmem>>, %arg4: memref<2x32xf32, #tpu.memory_space<vmem>>) attributes {dimension_semantics = [], scalar_prefetch = 0 : i64, scratch_operands = 0 : i64, tpu.core_type = #tpu.core_type<tc>} {
    %c0 = arith.constant 0 : index
    %c0_0 = arith.constant 0 : index
    %0 = vector.load %arg0[%c0, %c0_0] : memref<18x6xi32, #tpu.memory_space<vmem>>, vector<18x6xi32>
    %1 = tpu.iota {dimensions = array<i32: 1>} : vector<18x32xi32>
    %cst = arith.constant 0.000000e+00 : f32
    %2 = vector.broadcast %cst : f32 to vector<18x32xf32>
    %3 = vector.extract_strided_slice %0 {offsets = [0, 0], sizes = [18, 1], strides = [1, 1]} : vector<18x6xi32> to vector<18x1xi32>
    %4 = vector.broadcast %3 : vector<18x1xi32> to vector<18x32xi32>
    %5 = arith.cmpi eq, %1, %4 : vector<18x32xi32>
    %6 = arith.extui %5 : vector<18x32xi1> to vector<18x32xi32>
    %7 = arith.sitofp %6 : vector<18x32xi32> to vector<18x32xf32>
    %8 = arith.addf %2, %7 : vector<18x32xf32>
    %9 = vector.extract_strided_slice %0 {offsets = [0, 1], sizes = [18, 1], strides = [1, 1]} : vector<18x6xi32> to vector<18x1xi32>
    %10 = vector.broadcast %9 : vector<18x1xi32> to vector<18x32xi32>
    %11 = arith.cmpi eq, %1, %10 : vector<18x32xi32>
    %12 = arith.extui %11 : vector<18x32xi1> to vector<18x32xi32>
    %13 = arith.sitofp %12 : vector<18x32xi32> to vector<18x32xf32>
    %14 = arith.addf %8, %13 : vector<18x32xf32>
    %15 = vector.extract_strided_slice %0 {offsets = [0, 2], sizes = [18, 1], strides = [1, 1]} : vector<18x6xi32> to vector<18x1xi32>
    %16 = vector.broadcast %15 : vector<18x1xi32> to vector<18x32xi32>
    %17 = arith.cmpi eq, %1, %16 : vector<18x32xi32>
    %18 = arith.extui %17 : vector<18x32xi1> to vector<18x32xi32>
    %19 = arith.sitofp %18 : vector<18x32xi32> to vector<18x32xf32>
    %20 = arith.addf %14, %19 : vector<18x32xf32>
    %21 = vector.extract_strided_slice %0 {offsets = [0, 3], sizes = [18, 1], strides = [1, 1]} : vector<18x6xi32> to vector<18x1xi32>
    %22 = vector.broadcast %21 : vector<18x1xi32> to vector<18x32xi32>
    %23 = arith.cmpi eq, %1, %22 : vector<18x32xi32>
    %24 = arith.extui %23 : vector<18x32xi1> to vector<18x32xi32>
    %25 = arith.sitofp %24 : vector<18x32xi32> to vector<18x32xf32>
    %26 = arith.addf %20, %25 : vector<18x32xf32>
    %27 = vector.extract_strided_slice %0 {offsets = [0, 4], sizes = [18, 1], strides = [1, 1]} : vector<18x6xi32> to vector<18x1xi32>
    %28 = vector.broadcast %27 : vector<18x1xi32> to vector<18x32xi32>
    %29 = arith.cmpi eq, %1, %28 : vector<18x32xi32>
    %30 = arith.extui %29 : vector<18x32xi1> to vector<18x32xi32>
    %31 = arith.sitofp %30 : vector<18x32xi32> to vector<18x32xf32>
    %32 = arith.addf %26, %31 : vector<18x32xf32>
    %33 = vector.extract_strided_slice %0 {offsets = [0, 5], sizes = [18, 1], strides = [1, 1]} : vector<18x6xi32> to vector<18x1xi32>
    %34 = vector.broadcast %33 : vector<18x1xi32> to vector<18x32xi32>
    %35 = arith.cmpi eq, %1, %34 : vector<18x32xi32>
    %36 = arith.extui %35 : vector<18x32xi1> to vector<18x32xi32>
    %37 = arith.sitofp %36 : vector<18x32xi32> to vector<18x32xf32>
    %38 = arith.addf %32, %37 : vector<18x32xf32>
    %c0_1 = arith.constant 0 : index
    %c0_2 = arith.constant 0 : index
    %39 = vector.load %arg1[%c0_1, %c0_2] : memref<32x96xf32, #tpu.memory_space<vmem>>, vector<32x96xf32>
    %cst_3 = arith.constant dense<0.000000e+00> : vector<18x96xf32>
    %40 = tpu.matmul %38, %39, %cst_3 {dimension_numbers = #tpu.dot_dimension_numbers<[1], [0], [0], [1], [0, 0, 1, 1], [], []>} : vector<18x32xf32>, vector<32x96xf32>, vector<18x96xf32> -> vector<18x96xf32>
    %41 = vector.extract_strided_slice %40 {offsets = [0, 0], sizes = [16, 32], strides = [1, 1]} : vector<18x96xf32> to vector<16x32xf32>
    %42 = vector.shape_cast %41 : vector<16x32xf32> to vector<2x8x32xf32>
    %43 = vector.extract_strided_slice %40 {offsets = [0, 64], sizes = [16, 32], strides = [1, 1]} : vector<18x96xf32> to vector<16x32xf32>
    %44 = vector.shape_cast %43 : vector<16x32xf32> to vector<2x8x32xf32>
    %45 = vector.extract_strided_slice %40 {offsets = [16, 32], sizes = [2, 32], strides = [1, 1]} : vector<18x96xf32> to vector<2x32xf32>
    %46 = vector.shape_cast %45 : vector<2x32xf32> to vector<2x1x32xf32>
    "tpu.trace_start"() <{level = 10 : i32, message = "bqd,bsd->bqs"}> : () -> ()
    %cst_4 = arith.constant dense<0.000000e+00> : vector<2x1x8xf32>
    %47 = tpu.matmul %46, %42, %cst_4 {dimension_numbers = #tpu.dot_dimension_numbers<[2], [2], [1], [1], [0, 0, 0, 1, 1, 1], [0], [0]>} : vector<2x1x32xf32>, vector<2x8x32xf32>, vector<2x1x8xf32> -> vector<2x1x8xf32>
    "tpu.trace_stop"() : () -> ()
    %cst_5 = arith.constant dense<0xFF800000> : vector<2x1xf32>
    %48 = vector.multi_reduction <maximumf>, %47, %cst_5 [2] : vector<2x1x8xf32> to vector<2x1xf32>
    %49 = vector.shape_cast %48 : vector<2x1xf32> to vector<2x1x1xf32>
    %50 = vector.broadcast %49 : vector<2x1x1xf32> to vector<2x1x8xf32>
    %51 = arith.subf %47, %50 : vector<2x1x8xf32>
    %52 = math.exp %51 : vector<2x1x8xf32>
    %cst_6 = arith.constant dense<0.000000e+00> : vector<2x1xf32>
    %53 = vector.multi_reduction <add>, %52, %cst_6 [2] : vector<2x1x8xf32> to vector<2x1xf32>
    %54 = vector.shape_cast %53 : vector<2x1xf32> to vector<2x1x1xf32>
    %55 = tpu.reciprocal %54 {approx = true} : vector<2x1x1xf32> -> vector<2x1x1xf32>
    %56 = vector.broadcast %55 : vector<2x1x1xf32> to vector<2x1x8xf32>
    %57 = arith.mulf %52, %56 : vector<2x1x8xf32>
    "tpu.trace_start"() <{level = 10 : i32, message = "bqs,bsd->bqd"}> : () -> ()
    %cst_7 = arith.constant dense<0.000000e+00> : vector<2x1x32xf32>
    %58 = tpu.matmul %57, %44, %cst_7 {dimension_numbers = #tpu.dot_dimension_numbers<[2], [1], [1], [2], [0, 0, 0, 1, 1, 2], [0], [0]>} : vector<2x1x8xf32>, vector<2x8x32xf32>, vector<2x1x32xf32> -> vector<2x1x32xf32>
    "tpu.trace_stop"() : () -> ()
    %59 = arith.addf %58, %46 : vector<2x1x32xf32>
    "tpu.trace_start"() <{level = 10 : i32, message = "bqd,bsd->bqs"}> : () -> ()
    %cst_8 = arith.constant dense<0.000000e+00> : vector<2x1x8xf32>
    %60 = tpu.matmul %59, %42, %cst_8 {dimension_numbers = #tpu.dot_dimension_numbers<[2], [2], [1], [1], [0, 0, 0, 1, 1, 1], [0], [0]>} : vector<2x1x32xf32>, vector<2x8x32xf32>, vector<2x1x8xf32> -> vector<2x1x8xf32>
    "tpu.trace_stop"() : () -> ()
    %cst_9 = arith.constant dense<0xFF800000> : vector<2x1xf32>
    %61 = vector.multi_reduction <maximumf>, %60, %cst_9 [2] : vector<2x1x8xf32> to vector<2x1xf32>
    %62 = vector.shape_cast %61 : vector<2x1xf32> to vector<2x1x1xf32>
    %63 = vector.broadcast %62 : vector<2x1x1xf32> to vector<2x1x8xf32>
    %64 = arith.subf %60, %63 : vector<2x1x8xf32>
    %65 = math.exp %64 : vector<2x1x8xf32>
    %cst_10 = arith.constant dense<0.000000e+00> : vector<2x1xf32>
    %66 = vector.multi_reduction <add>, %65, %cst_10 [2] : vector<2x1x8xf32> to vector<2x1xf32>
    %67 = vector.shape_cast %66 : vector<2x1xf32> to vector<2x1x1xf32>
    %68 = tpu.reciprocal %67 {approx = true} : vector<2x1x1xf32> -> vector<2x1x1xf32>
    %69 = vector.broadcast %68 : vector<2x1x1xf32> to vector<2x1x8xf32>
    %70 = arith.mulf %65, %69 : vector<2x1x8xf32>
    "tpu.trace_start"() <{level = 10 : i32, message = "bqs,bsd->bqd"}> : () -> ()
    %cst_11 = arith.constant dense<0.000000e+00> : vector<2x1x32xf32>
    %71 = tpu.matmul %70, %44, %cst_11 {dimension_numbers = #tpu.dot_dimension_numbers<[2], [1], [1], [2], [0, 0, 0, 1, 1, 2], [0], [0]>} : vector<2x1x8xf32>, vector<2x8x32xf32>, vector<2x1x32xf32> -> vector<2x1x32xf32>
    "tpu.trace_stop"() : () -> ()
    %72 = arith.addf %71, %59 : vector<2x1x32xf32>
    "tpu.trace_start"() <{level = 10 : i32, message = "bqd,bsd->bqs"}> : () -> ()
    %cst_12 = arith.constant dense<0.000000e+00> : vector<2x1x8xf32>
    %73 = tpu.matmul %72, %42, %cst_12 {dimension_numbers = #tpu.dot_dimension_numbers<[2], [2], [1], [1], [0, 0, 0, 1, 1, 1], [0], [0]>} : vector<2x1x32xf32>, vector<2x8x32xf32>, vector<2x1x8xf32> -> vector<2x1x8xf32>
    "tpu.trace_stop"() : () -> ()
    %cst_13 = arith.constant dense<0xFF800000> : vector<2x1xf32>
    %74 = vector.multi_reduction <maximumf>, %73, %cst_13 [2] : vector<2x1x8xf32> to vector<2x1xf32>
    %75 = vector.shape_cast %74 : vector<2x1xf32> to vector<2x1x1xf32>
    %76 = vector.broadcast %75 : vector<2x1x1xf32> to vector<2x1x8xf32>
    %77 = arith.subf %73, %76 : vector<2x1x8xf32>
    %78 = math.exp %77 : vector<2x1x8xf32>
    %cst_14 = arith.constant dense<0.000000e+00> : vector<2x1xf32>
    %79 = vector.multi_reduction <add>, %78, %cst_14 [2] : vector<2x1x8xf32> to vector<2x1xf32>
    %80 = vector.shape_cast %79 : vector<2x1xf32> to vector<2x1x1xf32>
    %81 = tpu.reciprocal %80 {approx = true} : vector<2x1x1xf32> -> vector<2x1x1xf32>
    %82 = vector.broadcast %81 : vector<2x1x1xf32> to vector<2x1x8xf32>
    %83 = arith.mulf %78, %82 : vector<2x1x8xf32>
    "tpu.trace_start"() <{level = 10 : i32, message = "bqs,bsd->bqd"}> : () -> ()
    %cst_15 = arith.constant dense<0.000000e+00> : vector<2x1x32xf32>
    %84 = tpu.matmul %83, %44, %cst_15 {dimension_numbers = #tpu.dot_dimension_numbers<[2], [1], [1], [2], [0, 0, 0, 1, 1, 2], [0], [0]>} : vector<2x1x8xf32>, vector<2x8x32xf32>, vector<2x1x32xf32> -> vector<2x1x32xf32>
    "tpu.trace_stop"() : () -> ()
    %85 = arith.addf %84, %72 : vector<2x1x32xf32>
    %86 = vector.shape_cast %85 : vector<2x1x32xf32> to vector<2x32xf32>
    %c0_16 = arith.constant 0 : index
    %c0_17 = arith.constant 0 : index
    %87 = vector.load %arg2[%c0_16, %c0_17] : memref<32x32xf32, #tpu.memory_space<vmem>>, vector<32x32xf32>
    %cst_18 = arith.constant dense<0.000000e+00> : vector<2x32xf32>
    %88 = tpu.matmul %86, %87, %cst_18 {dimension_numbers = #tpu.dot_dimension_numbers<[1], [1], [0], [0], [0, 0, 1, 0], [], []>} : vector<2x32xf32>, vector<32x32xf32>, vector<2x32xf32> -> vector<2x32xf32>
    %c0_19 = arith.constant 0 : index
    %c0_20 = arith.constant 0 : index
    %89 = vector.load %arg3[%c0_19, %c0_20] : memref<1x32xf32, #tpu.memory_space<vmem>>, vector<1x32xf32>
    %90 = vector.broadcast %89 : vector<1x32xf32> to vector<2x32xf32>
    %91 = arith.addf %88, %90 : vector<2x32xf32>
    %c0_21 = arith.constant 0 : index
    %c0_22 = arith.constant 0 : index
    %92 = vector.load %arg4[%c0_21, %c0_22] : memref<2x32xf32, #tpu.memory_space<vmem>>, vector<2x32xf32>
    tpu.vector_store %arg4[%c0_21, %c0_22], %91 {strides = array<i32>} : memref<2x32xf32, #tpu.memory_space<vmem>>, vector<2x32xf32>,
    return
  }
}

</mosaic_0001>

<llo_original>
// kernel: emn_forward.1
$region0: #{emn_forward.1}
  #allocation0 [shape = 'u32[]', space=smem, size = 0x4, offset = 0x4, fixed_abs, tag = 'smem constant byte address 0x4 - core index']
  #allocation1 [shape = 'u32[144,128]{1,0:T(1,128)}', space=vmem, size = 0x12000, scoped, tag = 'internal scratch']
  %s0 = inlined_call_operand.vmem [shape: s32[18,6], index: 0, kind: input, shape index: {}]
  %s1 = inlined_call_operand.vmem [shape: f32[32,96], index: 1, kind: input, shape index: {}]
  %s2 = inlined_call_operand.vmem [shape: f32[32,32], index: 2, kind: input, shape index: {}]
  %s3 = inlined_call_operand.vmem [shape: f32[1,32], index: 3, kind: input, shape index: {}]
  %s4 = inlined_call_operand.hbm [shape: f32[2,32], index: 4, kind: output, shape index: {}]
  %s5 = sld [smem:[#allocation0]]
  $region26: #{emn_forward.1} parent=0
    _
  %s7 = ssub.s32 1, %s5
  %s8 = scalar_select 0, %s7, %s5
  $region1: #{emn_forward.1} parent=0
    #allocation2 [shape = 'u8[1024]{0}', space=vmem, size = 0x400, scoped, tag = 'output window, operand 0, single buffered']
    #allocation3 [shape = 's32[1]{0}', space=sflag, size = 0x4, scoped, tag = 'scoped memory for emn_forward.1']
    %9 = vsyncpa [#allocation3], 0
    // Predicated region
    $region2: #{emn_forward.1} parent=1 // pred_check
      _
    $region3: #{emn_forward.1} parent=1 // pred_check_branch
      %11 = sbr.rel (0) target = $region5
    $region4: #{emn_forward.1} parent=1 // pred_region
      _
    $region5: #{emn_forward.1} parent=1 // pred_fallthru
      _
    // Predicated region
    $region6: #{emn_forward.1} parent=1 // pred_check
      _
    $region7: #{emn_forward.1} parent=1 // pred_check_branch
      %13 = sbr.rel (0) target = $region9
    $region8: #{emn_forward.1} parent=1 // pred_region
      _
    $region9: #{emn_forward.1} parent=1 // pred_fallthru
      _
    // Predicated region
    $region10: #{emn_forward.1} parent=1 // pred_check
      _
    $region11: #{emn_forward.1} parent=1 // pred_check_branch
      %15 = sbr.rel (0) target = $region13
    $region12: #{emn_forward.1} parent=1 // pred_region
      _
    $region13: #{emn_forward.1} parent=1 // pred_fallthru
      _
    // Predicated region
    $region14: #{emn_forward.1} parent=1 // pred_check
      _
    $region15: #{emn_forward.1} parent=1 // pred_check_branch
      %17 = sbr.rel (0) target = $region17
    $region16: #{emn_forward.1} parent=1 // pred_region
      _
    $region17: #{emn_forward.1} parent=1 // pred_fallthru
      _
    %v18 = vld [vmem:[%s0] sm:$0xff]
    %v19 = vld [vmem:[%s0 + $0x8] sm:$0xff]
    %v20 = vld [vmem:[%s0 + $0x10] sm:$0x3]
    %v21 = vlaneseq
    %v22 = vand.u32 %v21, 127
    %23 = vset.pattern.permute.xlu0 0
    %24 = vperm.xlu0 %23, %v18
    %v25 = vpop.permute.xlu0 %24
    %26 = vset.pattern.permute.xlu0 0
    %27 = vperm.xlu0 %26, %v19
    %v28 = vpop.permute.xlu0 %27
    %29 = vset.pattern.permute.xlu0 0
    %30 = vperm.xlu0 %29, %v20
    %v31 = vpop.permute.xlu0 %30
    %vm32 = vcmp.eq.s32.totalorder %v22, %v25
    %vm33 = vcmp.eq.s32.totalorder %v22, %v28
    %vm34 = vcmp.eq.s32.totalorder %v22, %v31
    %v35 = vsel %vm32, 1, 0
    %v36 = vsel %vm33, 1, 0
    %v37 = vsel %vm34, 1, 0
    %v38 = vcvt.s32.f32 %v35
    %v39 = vcvt.s32.f32 %v36
    %v40 = vcvt.s32.f32 %v37
    %v41 = vadd.f32 %v38, 0.0
    %v42 = vadd.f32 %v39, 0.0
    %v43 = vadd.f32 %v40, 0.0
    %44 = vset.pattern.permute.xlu0 1
    %45 = vperm.xlu0 %44, %v18
    %v46 = vpop.permute.xlu0 %45
    %47 = vset.pattern.permute.xlu0 1
    %48 = vperm.xlu0 %47, %v19
    %v49 = vpop.permute.xlu0 %48
    %50 = vset.pattern.permute.xlu0 1
    %51 = vperm.xlu0 %50, %v20
    %v52 = vpop.permute.xlu0 %51
    %vm53 = vcmp.eq.s32.totalorder %v22, %v46
    %vm54 = vcmp.eq.s32.totalorder %v22, %v49
    %vm55 = vcmp.eq.s32.totalorder %v22, %v52
    %v56 = vsel %vm53, 1, 0
    %v57 = vsel %vm54, 1, 0
    %v58 = vsel %vm55, 1, 0
    %v59 = vcvt.s32.f32 %v56
    %v60 = vcvt.s32.f32 %v57
    %v61 = vcvt.s32.f32 %v58
    %v62 = vadd.f32 %v41, %v59
    %v63 = vadd.f32 %v42, %v60
    %v64 = vadd.f32 %v43, %v61
    %65 = vset.pattern.permute.xlu0 2
    %66 = vperm.xlu0 %65, %v18
    %v67 = vpop.permute.xlu0 %66
    %68 = vset.pattern.permute.xlu0 2
    %69 = vperm.xlu0 %68, %v19
    %v70 = vpop.permute.xlu0 %69
    %71 = vset.pattern.permute.xlu0 2
    %72 = vperm.xlu0 %71, %v20
    %v73 = vpop.permute.xlu0 %72
    %vm74 = vcmp.eq.s32.totalorder %v22, %v67
    %vm75 = vcmp.eq.s32.totalorder %v22, %v70
    %vm76 = vcmp.eq.s32.totalorder %v22, %v73
    %v77 = vsel %vm74, 1, 0
    %v78 = vsel %vm75, 1, 0
    %v79 = vsel %vm76, 1, 0
    %v80 = vcvt.s32.f32 %v77
    %v81 = vcvt.s32.f32 %v78
    %v82 = vcvt.s32.f32 %v79
    %v83 = vadd.f32 %v62, %v80
    %v84 = vadd.f32 %v63, %v81
    %v85 = vadd.f32 %v64, %v82
    %86 = vset.pattern.permute.xlu0 3
    %87 = vperm.xlu0 %86, %v18
    %v88 = vpop.permute.xlu0 %87
    %89 = vset.pattern.permute.xlu0 3
    %90 = vperm.xlu0 %89, %v19
    %v91 = vpop.permute.xlu0 %90
    %92 = vset.pattern.permute.xlu0 3
    %93 = vperm.xlu0 %92, %v20
    %v94 = vpop.permute.xlu0 %93
    %vm95 = vcmp.eq.s32.totalorder %v22, %v88
    %vm96 = vcmp.eq.s32.totalorder %v22, %v91
    %vm97 = vcmp.eq.s32.totalorder %v22, %v94
    %v98 = vsel %vm95, 1, 0
    %v99 = vsel %vm96, 1, 0
    %v100 = vsel %vm97, 1, 0
    %v101 = vcvt.s32.f32 %v98
    %v102 = vcvt.s32.f32 %v99
    %v103 = vcvt.s32.f32 %v100
    %v104 = vadd.f32 %v83, %v101
    %v105 = vadd.f32 %v84, %v102
    %v106 = vadd.f32 %v85, %v103
    %107 = vset.pattern.permute.xlu0 4
    %108 = vperm.xlu0 %107, %v18
    %v109 = vpop.permute.xlu0 %108
    %110 = vset.pattern.permute.xlu0 4
    %111 = vperm.xlu0 %110, %v19
    %v112 = vpop.permute.xlu0 %111
    %113 = vset.pattern.permute.xlu0 4
    %114 = vperm.xlu0 %113, %v20
    %v115 = vpop.permute.xlu0 %114
    %vm116 = vcmp.eq.s32.totalorder %v22, %v109
    %vm117 = vcmp.eq.s32.totalorder %v22, %v112
    %vm118 = vcmp.eq.s32.totalorder %v22, %v115
    %v119 = vsel %vm116, 1, 0
    %v120 = vsel %vm117, 1, 0
    %v121 = vsel %vm118, 1, 0
    %v122 = vcvt.s32.f32 %v119
    %v123 = vcvt.s32.f32 %v120
    %v124 = vcvt.s32.f32 %v121
    %v125 = vadd.f32 %v104, %v122
    %v126 = vadd.f32 %v105, %v123
    %v127 = vadd.f32 %v106, %v124
    %128 = vset.pattern.permute.xlu0 5
    %129 = vperm.xlu0 %128, %v18
    %v130 = vpop.permute.xlu0 %129
    %131 = vset.pattern.permute.xlu0 5
    %132 = vperm.xlu0 %131, %v19
    %v133 = vpop.permute.xlu0 %132
    %134 = vset.pattern.permute.xlu0 5
    %135 = vperm.xlu0 %134, %v20
    %v136 = vpop.permute.xlu0 %135
    %vm137 = vcmp.eq.s32.totalorder %v22, %v130
    %vm138 = vcmp.eq.s32.totalorder %v22, %v133
    %vm139 = vcmp.eq.s32.totalorder %v22, %v136
    %v140 = vsel %vm137, 1, 0
    %v141 = vsel %vm138, 1, 0
    %v142 = vsel %vm139, 1, 0
    %v143 = vcvt.s32.f32 %v140
    %v144 = vcvt.s32.f32 %v141
    %v145 = vcvt.s32.f32 %v142
    %v146 = vadd.f32 %v125, %v143
    %v147 = vadd.f32 %v126, %v144
    %v148 = vadd.f32 %v127, %v145
    %v149 = vld [vmem:[%s1] sm:$0xff]
    %v150 = vld [vmem:[%s1 + $0x8] sm:$0xff]
    %v151 = vld [vmem:[%s1 + $0x10] sm:$0xff]
    %v152 = vld [vmem:[%s1 + $0x18] sm:$0xff]
    %vm153 = vcmask 261120
    %v155 = vsel %vm153, %v146, 0
    %v158 = vsel %vm153, %v147, 0
    %v161 = vsel %vm153, %v148, 0
    %163 = vmatprep.subr.mxu0 0.0
    %164 = vmatpush1.msra.mxu0 %v149
    %165 = vmatprep.subr.mxu0 0.0
    %166 = vmatpush1.msra.mxu0 %v150
    %167 = vmatprep.subr.mxu0 0.0
    %168 = vmatpush1.msra.mxu0 %v151
    %169 = vmatprep.subr.mxu0 0.0
    %170 = vmatpush1.msra.mxu0 %v152
    %171 = vmatprep.subr.mxu0 0.0
    %172 = vmatpush1.msra.mxu0 0.0
    %173 = vmatprep.subr.mxu0 0.0
    %174 = vmatpush1.msra.mxu0 0.0
    %175 = vmatprep.subr.mxu0 0.0
    %176 = vmatpush1.msra.mxu0 0.0
    %177 = vmatprep.subr.mxu0 0.0
    %178 = vmatpush1.msra.mxu0 0.0
    %179 = vmatprep.subr.mxu0 0.0
    %180 = vmatpush1.msra.mxu0 0.0
    %181 = vmatprep.subr.mxu0 0.0
    %182 = vmatpush1.msra.mxu0 0.0
    %183 = vmatprep.subr.mxu0 0.0
    %184 = vmatpush1.msra.mxu0 0.0
    %185 = vmatprep.subr.mxu0 0.0
    %186 = vmatpush1.msra.mxu0 0.0
    %187 = vmatprep.subr.mxu0 0.0
    %188 = vmatpush1.msra.mxu0 0.0
    %189 = vmatprep.subr.mxu0 0.0
    %190 = vmatpush1.msra.mxu0 0.0
    %191 = vmatprep.subr.mxu0 0.0
    %192 = vmatpush1.msra.mxu0 0.0
    %193 = vmatprep.subr.mxu0 0.0
    %194 = vmatpush1.msra.mxu0 0.0
    %195 = vmatprep.subr.mxu0 0.0
    %196 = vmatpush1.msra.mxu0 0.0
    %197 = vmatprep.subr.mxu0 0.0
    %198 = vmatpush1.msra.mxu0 0.0
    %199 = vmatprep.subr.mxu0 0.0
    %200 = vmatpush1.msra.mxu0 0.0
    %201 = vmatprep.subr.mxu0 0.0
    %202 = vmatpush1.msra.mxu0 0.0
    %203 = vmatprep.subr.mxu0 0.0
    %204 = vmatpush1.msra.mxu0 0.0
    %205 = vmatprep.subr.mxu0 0.0
    %206 = vmatpush1.msra.mxu0 0.0
    %207 = vmatprep.subr.mxu0 0.0
    %208 = vmatpush1.msra.mxu0 0.0
    %209 = vmatprep.subr.mxu0 0.0
    %210 = vmatpush1.msra.mxu0 0.0
    %211 = vmatprep.subr.mxu0 0.0
    %212 = vmatpush1.msra.mxu0 0.0
    %213 = vmatprep.subr.mxu0 0.0
    %214 = vmatpush1.msra.mxu0 0.0
    %215 = vmatprep.subr.mxu0 0.0
    %216 = vmatpush1.msra.mxu0 0.0
    %217 = vmatprep.subr.mxu0 0.0
    %218 = vmatpush1.msra.mxu0 0.0
    %219 = vmatprep.subr.mxu0 0.0
    %220 = vmatpush1.msra.mxu0 0.0
    %221 = vmatprep.subr.mxu0 0.0
    %222 = vmatpush1.msra.mxu0 0.0
    %223 = vmatprep.subr.mxu0 0.0
    %224 = vmatpush1.msra.mxu0 0.0
    %225 = vmatprep.subr.mxu0 0.0
    %226 = vmatpush1.msra.mxu0 0.0
    %227 = vmatprep.mubr.f32.mxu0 0.0
    %228 = vmatmul.mubr.f32.gmra.mrb[0].mxu0 %v155
    %v229 = vpop.f32.mrb[0].mxu0
    %v230 = vadd.f32 0.0, %v229
    %v231 = vpop.f32.mrb[0].mxu0
    %232 = vmatprep.mubr.f32.mxu0 0.0
    %233 = vmatmul.mubr.f32.gmra.mrb[0].mxu0 %v158
    %v234 = vpop.f32.mrb[0].mxu0
    %v235 = vadd.f32 0.0, %v234
    %v236 = vpop.f32.mrb[0].mxu0
    %237 = vmatprep.mubr.f32.mxu0 0.0
    %238 = vmatmul.mubr.f32.gmra.mrb[0].mxu0 %v161
    %v239 = vpop.f32.mrb[0].mxu0
    %v240 = vadd.f32 0.0, %v239
    %v241 = vpop.f32.mrb[0].mxu0
    %242 = vdwg.mxu0
    %v245 = vunpack.c.l.s4 1966171168
    %v246 = vunpack.c.0.s8 %v245
    %v247 = vlaneseq
    %v248 = vshrl.u32 %v247, 7
    %v249 = vsub.s32 %v246, %v248
    %v250 = vrot.slane %v240, %v249
    %v251 = vcombine.high %v250, %v250
    %v253 = vunpack.c.l.s4 1966171168
    %v254 = vunpack.c.0.s8 %v253
    %v255 = vlaneseq
    %v256 = vshrl.u32 %v255, 7
    %v257 = vsub.s32 %v254, %v256
    %v258 = vrot.slane %v250, %v257
    %v260 = vunpack.c.l.s4 1966171168
    %v261 = vunpack.c.0.s8 %v260
    %v262 = vlaneseq
    %v263 = vshrl.u32 %v262, 7
    %v264 = vsub.s32 %v261, %v263
    %v265 = vrot.slane %v251, %v264
    %v266 = vlaneseq
    %v267 = vshrl.u32 %v266, 7
    %v268 = vsub.s32 0, %v267
    %v269 = vrot.slane %v258, %v268
    %270 = vrot.lane.b32.xlu0 %v269, 96
    %v271 = vpop.permute.xlu0 %270
    %v272 = vsel %vm153, %v271, 0
    %v275 = vsel %vm153, %v230, 0
    %277 = vmatprep.subr.mxu0 0.0
    %278 = vmatpush1.xpose.msra.mxu0 %v275
    %279 = vmatprep.subr.mxu0 0.0
    %280 = vmatpush1.xpose.msra.mxu0 0.0
    %281 = vmatprep.subr.mxu0 0.0
    %282 = vmatpush1.xpose.msra.mxu0 0.0
    %283 = vmatprep.subr.mxu0 0.0
    %284 = vmatpush1.xpose.msra.mxu0 0.0
    %285 = vmatprep.subr.mxu0 0.0
    %286 = vmatpush1.xpose.msra.mxu0 0.0
    %287 = vmatprep.subr.mxu0 0.0
    %288 = vmatpush1.xpose.msra.mxu0 0.0
    %289 = vmatprep.subr.mxu0 0.0
    %290 = vmatpush1.xpose.msra.mxu0 0.0
    %291 = vmatprep.subr.mxu0 0.0
    %292 = vmatpush1.xpose.msra.mxu0 0.0
    %293 = vmatprep.subr.mxu0 0.0
    %294 = vmatpush1.xpose.msra.mxu0 0.0
    %295 = vmatprep.subr.mxu0 0.0
    %296 = vmatpush1.xpose.msra.mxu0 0.0
    %297 = vmatprep.subr.mxu0 0.0
    %298 = vmatpush1.xpose.msra.mxu0 0.0
    %299 = vmatprep.subr.mxu0 0.0
    %300 = vmatpush1.xpose.msra.mxu0 0.0
    %301 = vmatprep.subr.mxu0 0.0
    %302 = vmatpush1.xpose.msra.mxu0 0.0
    %303 = vmatprep.subr.mxu0 0.0
    %304 = vmatpush1.xpose.msra.mxu0 0.0
    %305 = vmatprep.subr.mxu0 0.0
    %306 = vmatpush1.xpose.msra.mxu0 0.0
    %307 = vmatprep.subr.mxu0 0.0
    %308 = vmatpush1.xpose.msra.mxu0 0.0
    %309 = vmatprep.subr.mxu0 0.0
    %310 = vmatpush1.xpose.msra.mxu0 0.0
    %311 = vmatprep.subr.mxu0 0.0
    %312 = vmatpush1.xpose.msra.mxu0 0.0
    %313 = vmatprep.subr.mxu0 0.0
    %314 = vmatpush1.xpose.msra.mxu0 0.0
    %315 = vmatprep.subr.mxu0 0.0
    %316 = vmatpush1.xpose.msra.mxu0 0.0
    %317 = vmatprep.subr.mxu0 0.0
    %318 = vmatpush1.xpose.msra.mxu0 0.0
    %319 = vmatprep.subr.mxu0 0.0
    %320 = vmatpush1.xpose.msra.mxu0 0.0
    %321 = vmatprep.subr.mxu0 0.0
    %322 = vmatpush1.xpose.msra.mxu0 0.0
    %323 = vmatprep.subr.mxu0 0.0
    %324 = vmatpush1.xpose.msra.mxu0 0.0
    %325 = vmatprep.subr.mxu0 0.0
    %326 = vmatpush1.xpose.msra.mxu0 0.0
    %327 = vmatprep.subr.mxu0 0.0
    %328 = vmatpush1.xpose.msra.mxu0 0.0
    %329 = vmatprep.subr.mxu0 0.0
    %330 = vmatpush1.xpose.msra.mxu0 0.0
    %331 = vmatprep.subr.mxu0 0.0
    %332 = vmatpush1.xpose.msra.mxu0 0.0
    %333 = vmatprep.subr.mxu0 0.0
    %334 = vmatpush1.xpose.msra.mxu0 0.0
    %335 = vmatprep.subr.mxu0 0.0
    %336 = vmatpush1.xpose.msra.mxu0 0.0
    %337 = vmatprep.subr.mxu0 0.0
    %338 = vmatpush1.xpose.msra.mxu0 0.0
    %339 = vmatprep.subr.mxu0 0.0
    %340 = vmatpush1.xpose.msra.mxu0 0.0
    %341 = vmatprep.mubr.f32.mxu0 0.0
    %342 = vmatmul.mubr.f32.gmra.mrb[0].mxu0 %v272
    %v343 = vpop.f32.mrb[0].mxu0
    %v344 = vadd.f32 0.0, %v343
    %v345 = vpop.f32.mrb[0].mxu0
    %346 = vdwg.mxu0
    %v347 = vlaneseq
    %v348 = vshrl.u32 %v347, 7
    %v349 = vsub.s32 0, %v348
    %v350 = vrot.slane %v265, %v349
    %351 = vrot.lane.b32.xlu0 %v350, 96
    %v352 = vpop.permute.xlu0 %351
    %v353 = vsel %vm153, %v352, 0
    %v356 = vsel %vm153, %v235, 0
    %358 = vmatprep.subr.mxu0 0.0
    %359 = vmatpush1.xpose.msra.mxu0 %v356
    %360 = vmatprep.subr.mxu0 0.0
    %361 = vmatpush1.xpose.msra.mxu0 0.0
    %362 = vmatprep.subr.mxu0 0.0
    %363 = vmatpush1.xpose.msra.mxu0 0.0
    %364 = vmatprep.subr.mxu0 0.0
    %365 = vmatpush1.xpose.msra.mxu0 0.0
    %366 = vmatprep.subr.mxu0 0.0
    %367 = vmatpush1.xpose.msra.mxu0 0.0
    %368 = vmatprep.subr.mxu0 0.0
    %369 = vmatpush1.xpose.msra.mxu0 0.0
    %370 = vmatprep.subr.mxu0 0.0
    %371 = vmatpush1.xpose.msra.mxu0 0.0
    %372 = vmatprep.subr.mxu0 0.0
    %373 = vmatpush1.xpose.msra.mxu0 0.0
    %374 = vmatprep.subr.mxu0 0.0
    %375 = vmatpush1.xpose.msra.mxu0 0.0
    %376 = vmatprep.subr.mxu0 0.0
    %377 = vmatpush1.xpose.msra.mxu0 0.0
    %378 = vmatprep.subr.mxu0 0.0
    %379 = vmatpush1.xpose.msra.mxu0 0.0
    %380 = vmatprep.subr.mxu0 0.0
    %381 = vmatpush1.xpose.msra.mxu0 0.0
    %382 = vmatprep.subr.mxu0 0.0
    %383 = vmatpush1.xpose.msra.mxu0 0.0
    %384 = vmatprep.subr.mxu0 0.0
    %385 = vmatpush1.xpose.msra.mxu0 0.0
    %386 = vmatprep.subr.mxu0 0.0
    %387 = vmatpush1.xpose.msra.mxu0 0.0
    %388 = vmatprep.subr.mxu0 0.0
    %389 = vmatpush1.xpose.msra.mxu0 0.0
    %390 = vmatprep.subr.mxu0 0.0
    %391 = vmatpush1.xpose.msra.mxu0 0.0
    %392 = vmatprep.subr.mxu0 0.0
    %393 = vmatpush1.xpose.msra.mxu0 0.0
    %394 = vmatprep.subr.mxu0 0.0
    %395 = vmatpush1.xpose.msra.mxu0 0.0
    %396 = vmatprep.subr.mxu0 0.0
    %397 = vmatpush1.xpose.msra.mxu0 0.0
    %398 = vmatprep.subr.mxu0 0.0
    %399 = vmatpush1.xpose.msra.mxu0 0.0
    %400 = vmatprep.subr.mxu0 0.0
    %401 = vmatpush1.xpose.msra.mxu0 0.0
    %402 = vmatprep.subr.mxu0 0.0
    %403 = vmatpush1.xpose.msra.mxu0 0.0
    %404 = vmatprep.subr.mxu0 0.0
    %405 = vmatpush1.xpose.msra.mxu0 0.0
    %406 = vmatprep.subr.mxu0 0.0
    %407 = vmatpush1.xpose.msra.mxu0 0.0
    %408 = vmatprep.subr.mxu0 0.0
    %409 = vmatpush1.xpose.msra.mxu0 0.0
    %410 = vmatprep.subr.mxu0 0.0
    %411 = vmatpush1.xpose.msra.mxu0 0.0
    %412 = vmatprep.subr.mxu0 0.0
    %413 = vmatpush1.xpose.msra.mxu0 0.0
    %414 = vmatprep.subr.mxu0 0.0
    %415 = vmatpush1.xpose.msra.mxu0 0.0
    %416 = vmatprep.subr.mxu0 0.0
    %417 = vmatpush1.xpose.msra.mxu0 0.0
    %418 = vmatprep.subr.mxu0 0.0
    %419 = vmatpush1.xpose.msra.mxu0 0.0
    %420 = vmatprep.subr.mxu0 0.0
    %421 = vmatpush1.xpose.msra.mxu0 0.0
    %422 = vmatprep.mubr.f32.mxu0 0.0
    %423 = vmatmul.mubr.f32.gmra.mrb[0].mxu0 %v353
    %v424 = vpop.f32.mrb[0].mxu0
    %v425 = vadd.f32 0.0, %v424
    %v426 = vpop.f32.mrb[0].mxu0
    %427 = vdwg.mxu0
    %vm428 = vcmask 57344
    %v429 = vsel %vm428, %v344, -inf
    %430 = vmax.xlane.f32.xlu0 %v429
    %v431 = vpop.xlane.xlu0 %430
    %v432 = vsel %vm428, %v425, -inf
    %433 = vmax.xlane.f32.xlu0 %v432
    %v434 = vpop.xlane.xlu0 %433
    %v435 = vsub.f32 %v344, %v431
    %v436 = vsub.f32 %v425, %v434
    %v437 = vmul.f32 %v435, 1.442695
    %v438 = vpow.pop %v437
    %v439 = vmul.f32 %v436, 1.442695
    %v440 = vpow.pop %v439
    %v441 = vsel %vm428, %v438, 0.0
    %442 = vadd.xlane.f32.xlu0 %v441
    %v443 = vpop.xlane.xlu0 %442
    %v444 = vsel %vm428, %v440, 0.0
    %445 = vadd.xlane.f32.xlu0 %v444
    %v446 = vpop.xlane.xlu0 %445
    %v447 = vrcp.pop %v443
    %v448 = vrcp.pop %v446
    %v449 = vmul.f32 %v438, %v447
    %v450 = vmul.f32 %v440, %v448
    %451 = vrot.lane.b32.xlu0 %v230, 64
    %v452 = vpop.permute.xlu0 %451
    %vm455 = vcmask 64512
    %v457 = vsel %vm455, %v449, 0
    %459 = vmatprep.subr.mxu0 0.0
    %460 = vmatpush1.msra.mxu0 %v452
    %461 = vmatprep.subr.mxu0 0.0
    %462 = vmatpush1.msra.mxu0 0.0
    %463 = vmatprep.subr.mxu0 0.0
    %464 = vmatpush1.msra.mxu0 0.0
    %465 = vmatprep.subr.mxu0 0.0
    %466 = vmatpush1.msra.mxu0 0.0
    %467 = vmatprep.subr.mxu0 0.0
    %468 = vmatpush1.msra.mxu0 0.0
    %469 = vmatprep.subr.mxu0 0.0
    %470 = vmatpush1.msra.mxu0 0.0
    %471 = vmatprep.subr.mxu0 0.0
    %472 = vmatpush1.msra.mxu0 0.0
    %473 = vmatprep.subr.mxu0 0.0
    %474 = vmatpush1.msra.mxu0 0.0
    %475 = vmatprep.subr.mxu0 0.0
    %476 = vmatpush1.msra.mxu0 0.0
    %477 = vmatprep.subr.mxu0 0.0
    %478 = vmatpush1.msra.mxu0 0.0
    %479 = vmatprep.subr.mxu0 0.0
    %480 = vmatpush1.msra.mxu0 0.0
    %481 = vmatprep.subr.mxu0 0.0
    %482 = vmatpush1.msra.mxu0 0.0
    %483 = vmatprep.subr.mxu0 0.0
    %484 = vmatpush1.msra.mxu0 0.0
    %485 = vmatprep.subr.mxu0 0.0
    %486 = vmatpush1.msra.mxu0 0.0
    %487 = vmatprep.subr.mxu0 0.0
    %488 = vmatpush1.msra.mxu0 0.0
    %489 = vmatprep.subr.mxu0 0.0
    %490 = vmatpush1.msra.mxu0 0.0
    %491 = vmatprep.subr.mxu0 0.0
    %492 = vmatpush1.msra.mxu0 0.0
    %493 = vmatprep.subr.mxu0 0.0
    %494 = vmatpush1.msra.mxu0 0.0
    %495 = vmatprep.subr.mxu0 0.0
    %496 = vmatpush1.msra.mxu0 0.0
    %497 = vmatprep.subr.mxu0 0.0
    %498 = vmatpush1.msra.mxu0 0.0
    %499 = vmatprep.subr.mxu0 0.0
    %500 = vmatpush1.msra.mxu0 0.0
    %501 = vmatprep.subr.mxu0 0.0
    %502 = vmatpush1.msra.mxu0 0.0
    %503 = vmatprep.subr.mxu0 0.0
    %504 = vmatpush1.msra.mxu0 0.0
    %505 = vmatprep.subr.mxu0 0.0
    %506 = vmatpush1.msra.mxu0 0.0
    %507 = vmatprep.subr.mxu0 0.0
    %508 = vmatpush1.msra.mxu0 0.0
    %509 = vmatprep.subr.mxu0 0.0
    %510 = vmatpush1.msra.mxu0 0.0
    %511 = vmatprep.subr.mxu0 0.0
    %512 = vmatpush1.msra.mxu0 0.0
    %513 = vmatprep.subr.mxu0 0.0
    %514 = vmatpush1.msra.mxu0 0.0
    %515 = vmatprep.subr.mxu0 0.0
    %516 = vmatpush1.msra.mxu0 0.0
    %517 = vmatprep.subr.mxu0 0.0
    %518 = vmatpush1.msra.mxu0 0.0
    %519 = vmatprep.subr.mxu0 0.0
    %520 = vmatpush1.msra.mxu0 0.0
    %521 = vmatprep.subr.mxu0 0.0
    %522 = vmatpush1.msra.mxu0 0.0
    %523 = vmatprep.mubr.f32.mxu0 0.0
    %524 = vmatmul.mubr.f32.gmra.mrb[0].mxu0 %v457
    %v525 = vpop.f32.mrb[0].mxu0
    %v526 = vadd.f32 %v271, %v525
    %v527 = vpop.f32.mrb[0].mxu0
    %528 = vdwg.mxu0
    %529 = vrot.lane.b32.xlu0 %v235, 64
    %v530 = vpop.permute.xlu0 %529
    %v534 = vsel %vm455, %v450, 0
    %536 = vmatprep.subr.mxu0 0.0
    %537 = vmatpush1.msra.mxu0 %v530
    %538 = vmatprep.subr.mxu0 0.0
    %539 = vmatpush1.msra.mxu0 0.0
    %540 = vmatprep.subr.mxu0 0.0
    %541 = vmatpush1.msra.mxu0 0.0
    %542 = vmatprep.subr.mxu0 0.0
    %543 = vmatpush1.msra.mxu0 0.0
    %544 = vmatprep.subr.mxu0 0.0
    %545 = vmatpush1.msra.mxu0 0.0
    %546 = vmatprep.subr.mxu0 0.0
    %547 = vmatpush1.msra.mxu0 0.0
    %548 = vmatprep.subr.mxu0 0.0
    %549 = vmatpush1.msra.mxu0 0.0
    %550 = vmatprep.subr.mxu0 0.0
    %551 = vmatpush1.msra.mxu0 0.0
    %552 = vmatprep.subr.mxu0 0.0
    %553 = vmatpush1.msra.mxu0 0.0
    %554 = vmatprep.subr.mxu0 0.0
    %555 = vmatpush1.msra.mxu0 0.0
    %556 = vmatprep.subr.mxu0 0.0
    %557 = vmatpush1.msra.mxu0 0.0
    %558 = vmatprep.subr.mxu0 0.0
    %559 = vmatpush1.msra.mxu0 0.0
    %560 = vmatprep.subr.mxu0 0.0
    %561 = vmatpush1.msra.mxu0 0.0
    %562 = vmatprep.subr.mxu0 0.0
    %563 = vmatpush1.msra.mxu0 0.0
    %564 = vmatprep.subr.mxu0 0.0
    %565 = vmatpush1.msra.mxu0 0.0
    %566 = vmatprep.subr.mxu0 0.0
    %567 = vmatpush1.msra.mxu0 0.0
    %568 = vmatprep.subr.mxu0 0.0
    %569 = vmatpush1.msra.mxu0 0.0
    %570 = vmatprep.subr.mxu0 0.0
    %571 = vmatpush1.msra.mxu0 0.0
    %572 = vmatprep.subr.mxu0 0.0
    %573 = vmatpush1.msra.mxu0 0.0
    %574 = vmatprep.subr.mxu0 0.0
    %575 = vmatpush1.msra.mxu0 0.0
    %576 = vmatprep.subr.mxu0 0.0
    %577 = vmatpush1.msra.mxu0 0.0
    %578 = vmatprep.subr.mxu0 0.0
    %579 = vmatpush1.msra.mxu0 0.0
    %580 = vmatprep.subr.mxu0 0.0
    %581 = vmatpush1.msra.mxu0 0.0
    %582 = vmatprep.subr.mxu0 0.0
    %583 = vmatpush1.msra.mxu0 0.0
    %584 = vmatprep.subr.mxu0 0.0
    %585 = vmatpush1.msra.mxu0 0.0
    %586 = vmatprep.subr.mxu0 0.0
    %587 = vmatpush1.msra.mxu0 0.0
    %588 = vmatprep.subr.mxu0 0.0
    %589 = vmatpush1.msra.mxu0 0.0
    %590 = vmatprep.subr.mxu0 0.0
    %591 = vmatpush1.msra.mxu0 0.0
    %592 = vmatprep.subr.mxu0 0.0
    %593 = vmatpush1.msra.mxu0 0.0
    %594 = vmatprep.subr.mxu0 0.0
    %595 = vmatpush1.msra.mxu0 0.0
    %596 = vmatprep.subr.mxu0 0.0
    %597 = vmatpush1.msra.mxu0 0.0
    %598 = vmatprep.subr.mxu0 0.0
    %599 = vmatpush1.msra.mxu0 0.0
    %600 = vmatprep.mubr.f32.mxu0 0.0
    %601 = vmatmul.mubr.f32.gmra.mrb[0].mxu0 %v534
    %v602 = vpop.f32.mrb[0].mxu0
    %v603 = vadd.f32 %v352, %v602
    %v604 = vpop.f32.mrb[0].mxu0
    %605 = vdwg.mxu0
    %v607 = vsel %vm153, %v526, 0
    %609 = vmatprep.subr.mxu0 0.0
    %610 = vmatpush1.xpose.msra.mxu0 %v275
    %611 = vmatprep.subr.mxu0 0.0
    %612 = vmatpush1.xpose.msra.mxu0 0.0
    %613 = vmatprep.subr.mxu0 0.0
    %614 = vmatpush1.xpose.msra.mxu0 0.0
    %615 = vmatprep.subr.mxu0 0.0
    %616 = vmatpush1.xpose.msra.mxu0 0.0
    %617 = vmatprep.subr.mxu0 0.0
    %618 = vmatpush1.xpose.msra.mxu0 0.0
    %619 = vmatprep.subr.mxu0 0.0
    %620 = vmatpush1.xpose.msra.mxu0 0.0
    %621 = vmatprep.subr.mxu0 0.0
    %622 = vmatpush1.xpose.msra.mxu0 0.0
    %623 = vmatprep.subr.mxu0 0.0
    %624 = vmatpush1.xpose.msra.mxu0 0.0
    %625 = vmatprep.subr.mxu0 0.0
    %626 = vmatpush1.xpose.msra.mxu0 0.0
    %627 = vmatprep.subr.mxu0 0.0
    %628 = vmatpush1.xpose.msra.mxu0 0.0
    %629 = vmatprep.subr.mxu0 0.0
    %630 = vmatpush1.xpose.msra.mxu0 0.0
    %631 = vmatprep.subr.mxu0 0.0
    %632 = vmatpush1.xpose.msra.mxu0 0.0
    %633 = vmatprep.subr.mxu0 0.0
    %634 = vmatpush1.xpose.msra.mxu0 0.0
    %635 = vmatprep.subr.mxu0 0.0
    %636 = vmatpush1.xpose.msra.mxu0 0.0
    %637 = vmatprep.subr.mxu0 0.0
    %638 = vmatpush1.xpose.msra.mxu0 0.0
    %639 = vmatprep.subr.mxu0 0.0
    %640 = vmatpush1.xpose.msra.mxu0 0.0
    %641 = vmatprep.subr.mxu0 0.0
    %642 = vmatpush1.xpose.msra.mxu0 0.0
    %643 = vmatprep.subr.mxu0 0.0
    %644 = vmatpush1.xpose.msra.mxu0 0.0
    %645 = vmatprep.subr.mxu0 0.0
    %646 = vmatpush1.xpose.msra.mxu0 0.0
    %647 = vmatprep.subr.mxu0 0.0
    %648 = vmatpush1.xpose.msra.mxu0 0.0
    %649 = vmatprep.subr.mxu0 0.0
    %650 = vmatpush1.xpose.msra.mxu0 0.0
    %651 = vmatprep.subr.mxu0 0.0
    %652 = vmatpush1.xpose.msra.mxu0 0.0
    %653 = vmatprep.subr.mxu0 0.0
    %654 = vmatpush1.xpose.msra.mxu0 0.0
    %655 = vmatprep.subr.mxu0 0.0
    %656 = vmatpush1.xpose.msra.mxu0 0.0
    %657 = vmatprep.subr.mxu0 0.0
    %658 = vmatpush1.xpose.msra.mxu0 0.0
    %659 = vmatprep.subr.mxu0 0.0
    %660 = vmatpush1.xpose.msra.mxu0 0.0
    %661 = vmatprep.subr.mxu0 0.0
    %662 = vmatpush1.xpose.msra.mxu0 0.0
    %663 = vmatprep.subr.mxu0 0.0
    %664 = vmatpush1.xpose.msra.mxu0 0.0
    %665 = vmatprep.subr.mxu0 0.0
    %666 = vmatpush1.xpose.msra.mxu0 0.0
    %667 = vmatprep.subr.mxu0 0.0
    %668 = vmatpush1.xpose.msra.mxu0 0.0
    %669 = vmatprep.subr.mxu0 0.0
    %670 = vmatpush1.xpose.msra.mxu0 0.0
    %671 = vmatprep.subr.mxu0 0.0
    %672 = vmatpush1.xpose.msra.mxu0 0.0
    %673 = vmatprep.mubr.f32.mxu0 0.0
    %674 = vmatmul.mubr.f32.gmra.mrb[0].mxu0 %v607
    %v675 = vpop.f32.mrb[0].mxu0
    %v676 = vadd.f32 0.0, %v675
    %v677 = vpop.f32.mrb[0].mxu0
    %678 = vdwg.mxu0
    %v680 = vsel %vm153, %v603, 0
    %682 = vmatprep.subr.mxu0 0.0
    %683 = vmatpush1.xpose.msra.mxu0 %v356
    %684 = vmatprep.subr.mxu0 0.0
    %685 = vmatpush1.xpose.msra.mxu0 0.0
    %686 = vmatprep.subr.mxu0 0.0
    %687 = vmatpush1.xpose.msra.mxu0 0.0
    %688 = vmatprep.subr.mxu0 0.0
    %689 = vmatpush1.xpose.msra.mxu0 0.0
    %690 = vmatprep.subr.mxu0 0.0
    %691 = vmatpush1.xpose.msra.mxu0 0.0
    %692 = vmatprep.subr.mxu0 0.0
    %693 = vmatpush1.xpose.msra.mxu0 0.0
    %694 = vmatprep.subr.mxu0 0.0
    %695 = vmatpush1.xpose.msra.mxu0 0.0
    %696 = vmatprep.subr.mxu0 0.0
    %697 = vmatpush1.xpose.msra.mxu0 0.0
    %698 = vmatprep.subr.mxu0 0.0
    %699 = vmatpush1.xpose.msra.mxu0 0.0
    %700 = vmatprep.subr.mxu0 0.0
    %701 = vmatpush1.xpose.msra.mxu0 0.0
    %702 = vmatprep.subr.mxu0 0.0
    %703 = vmatpush1.xpose.msra.mxu0 0.0
    %704 = vmatprep.subr.mxu0 0.0
    %705 = vmatpush1.xpose.msra.mxu0 0.0
    %706 = vmatprep.subr.mxu0 0.0
    %707 = vmatpush1.xpose.msra.mxu0 0.0
    %708 = vmatprep.subr.mxu0 0.0
    %709 = vmatpush1.xpose.msra.mxu0 0.0
    %710 = vmatprep.subr.mxu0 0.0
    %711 = vmatpush1.xpose.msra.mxu0 0.0
    %712 = vmatprep.subr.mxu0 0.0
    %713 = vmatpush1.xpose.msra.mxu0 0.0
    %714 = vmatprep.subr.mxu0 0.0
    %715 = vmatpush1.xpose.msra.mxu0 0.0
    %716 = vmatprep.subr.mxu0 0.0
    %717 = vmatpush1.xpose.msra.mxu0 0.0
    %718 = vmatprep.subr.mxu0 0.0
    %719 = vmatpush1.xpose.msra.mxu0 0.0
    %720 = vmatprep.subr.mxu0 0.0
    %721 = vmatpush1.xpose.msra.mxu0 0.0
    %722 = vmatprep.subr.mxu0 0.0
    %723 = vmatpush1.xpose.msra.mxu0 0.0
    %724 = vmatprep.subr.mxu0 0.0
    %725 = vmatpush1.xpose.msra.mxu0 0.0
    %726 = vmatprep.subr.mxu0 0.0
    %727 = vmatpush1.xpose.msra.mxu0 0.0
    %728 = vmatprep.subr.mxu0 0.0
    %729 = vmatpush1.xpose.msra.mxu0 0.0
    %730 = vmatprep.subr.mxu0 0.0
    %731 = vmatpush1.xpose.msra.mxu0 0.0
    %732 = vmatprep.subr.mxu0 0.0
    %733 = vmatpush1.xpose.msra.mxu0 0.0
    %734 = vmatprep.subr.mxu0 0.0
    %735 = vmatpush1.xpose.msra.mxu0 0.0
    %736 = vmatprep.subr.mxu0 0.0
    %737 = vmatpush1.xpose.msra.mxu0 0.0
    %738 = vmatprep.subr.mxu0 0.0
    %739 = vmatpush1.xpose.msra.mxu0 0.0
    %740 = vmatprep.subr.mxu0 0.0
    %741 = vmatpush1.xpose.msra.mxu0 0.0
    %742 = vmatprep.subr.mxu0 0.0
    %743 = vmatpush1.xpose.msra.mxu0 0.0
    %744 = vmatprep.subr.mxu0 0.0
    %745 = vmatpush1.xpose.msra.mxu0 0.0
    %746 = vmatprep.mubr.f32.mxu0 0.0
    %747 = vmatmul.mubr.f32.gmra.mrb[0].mxu0 %v680
    %v748 = vpop.f32.mrb[0].mxu0
    %v749 = vadd.f32 0.0, %v748
    %v750 = vpop.f32.mrb[0].mxu0
    %751 = vdwg.mxu0
    %v752 = vsel %vm428, %v676, -inf
    %753 = vmax.xlane.f32.xlu0 %v752
    %v754 = vpop.xlane.xlu0 %753
    %v755 = vsel %vm428, %v749, -inf
    %756 = vmax.xlane.f32.xlu0 %v755
    %v757 = vpop.xlane.xlu0 %756
    %v758 = vsub.f32 %v676, %v754
    %v759 = vsub.f32 %v749, %v757
    %v760 = vmul.f32 %v758, 1.442695
    %v761 = vpow.pop %v760
    %v762 = vmul.f32 %v759, 1.442695
    %v763 = vpow.pop %v762
    %v764 = vsel %vm428, %v761, 0.0
    %765 = vadd.xlane.f32.xlu0 %v764
    %v766 = vpop.xlane.xlu0 %765
    %v767 = vsel %vm428, %v763, 0.0
    %768 = vadd.xlane.f32.xlu0 %v767
    %v769 = vpop.xlane.xlu0 %768
    %v770 = vrcp.pop %v766
    %v771 = vrcp.pop %v769
    %v772 = vmul.f32 %v761, %v770
    %v773 = vmul.f32 %v763, %v771
    %v775 = vsel %vm455, %v772, 0
    %777 = vmatprep.subr.mxu0 0.0
    %778 = vmatpush1.msra.mxu0 %v452
    %779 = vmatprep.subr.mxu0 0.0
    %780 = vmatpush1.msra.mxu0 0.0
    %781 = vmatprep.subr.mxu0 0.0
    %782 = vmatpush1.msra.mxu0 0.0
    %783 = vmatprep.subr.mxu0 0.0
    %784 = vmatpush1.msra.mxu0 0.0
    %785 = vmatprep.subr.mxu0 0.0
    %786 = vmatpush1.msra.mxu0 0.0
    %787 = vmatprep.subr.mxu0 0.0
    %788 = vmatpush1.msra.mxu0 0.0
    %789 = vmatprep.subr.mxu0 0.0
    %790 = vmatpush1.msra.mxu0 0.0
    %791 = vmatprep.subr.mxu0 0.0
    %792 = vmatpush1.msra.mxu0 0.0
    %793 = vmatprep.subr.mxu0 0.0
    %794 = vmatpush1.msra.mxu0 0.0
    %795 = vmatprep.subr.mxu0 0.0
    %796 = vmatpush1.msra.mxu0 0.0
    %797 = vmatprep.subr.mxu0 0.0
    %798 = vmatpush1.msra.mxu0 0.0
    %799 = vmatprep.subr.mxu0 0.0
    %800 = vmatpush1.msra.mxu0 0.0
    %801 = vmatprep.subr.mxu0 0.0
    %802 = vmatpush1.msra.mxu0 0.0
    %803 = vmatprep.subr.mxu0 0.0
    %804 = vmatpush1.msra.mxu0 0.0
    %805 = vmatprep.subr.mxu0 0.0
    %806 = vmatpush1.msra.mxu0 0.0
    %807 = vmatprep.subr.mxu0 0.0
    %808 = vmatpush1.msra.mxu0 0.0
    %809 = vmatprep.subr.mxu0 0.0
    %810 = vmatpush1.msra.mxu0 0.0
    %811 = vmatprep.subr.mxu0 0.0
    %812 = vmatpush1.msra.mxu0 0.0
    %813 = vmatprep.subr.mxu0 0.0
    %814 = vmatpush1.msra.mxu0 0.0
    %815 = vmatprep.subr.mxu0 0.0
    %816 = vmatpush1.msra.mxu0 0.0
    %817 = vmatprep.subr.mxu0 0.0
    %818 = vmatpush1.msra.mxu0 0.0
    %819 = vmatprep.subr.mxu0 0.0
    %820 = vmatpush1.msra.mxu0 0.0
    %821 = vmatprep.subr.mxu0 0.0
    %822 = vmatpush1.msra.mxu0 0.0
    %823 = vmatprep.subr.mxu0 0.0
    %824 = vmatpush1.msra.mxu0 0.0
    %825 = vmatprep.subr.mxu0 0.0
    %826 = vmatpush1.msra.mxu0 0.0
    %827 = vmatprep.subr.mxu0 0.0
    %828 = vmatpush1.msra.mxu0 0.0
    %829 = vmatprep.subr.mxu0 0.0
    %830 = vmatpush1.msra.mxu0 0.0
    %831 = vmatprep.subr.mxu0 0.0
    %832 = vmatpush1.msra.mxu0 0.0
    %833 = vmatprep.subr.mxu0 0.0
    %834 = vmatpush1.msra.mxu0 0.0
    %835 = vmatprep.subr.mxu0 0.0
    %836 = vmatpush1.msra.mxu0 0.0
    %837 = vmatprep.subr.mxu0 0.0
    %838 = vmatpush1.msra.mxu0 0.0
    %839 = vmatprep.subr.mxu0 0.0
    %840 = vmatpush1.msra.mxu0 0.0
    %841 = vmatprep.mubr.f32.mxu0 0.0
    %842 = vmatmul.mubr.f32.gmra.mrb[0].mxu0 %v775
    %v843 = vpop.f32.mrb[0].mxu0
    %v844 = vadd.f32 %v526, %v843
    %v845 = vpop.f32.mrb[0].mxu0
    %846 = vdwg.mxu0
    %v848 = vsel %vm455, %v773, 0
    %850 = vmatprep.subr.mxu0 0.0
    %851 = vmatpush1.msra.mxu0 %v530
    %852 = vmatprep.subr.mxu0 0.0
    %853 = vmatpush1.msra.mxu0 0.0
    %854 = vmatprep.subr.mxu0 0.0
    %855 = vmatpush1.msra.mxu0 0.0
    %856 = vmatprep.subr.mxu0 0.0
    %857 = vmatpush1.msra.mxu0 0.0
    %858 = vmatprep.subr.mxu0 0.0
    %859 = vmatpush1.msra.mxu0 0.0
    %860 = vmatprep.subr.mxu0 0.0
    %861 = vmatpush1.msra.mxu0 0.0
    %862 = vmatprep.subr.mxu0 0.0
    %863 = vmatpush1.msra.mxu0 0.0
    %864 = vmatprep.subr.mxu0 0.0
    %865 = vmatpush1.msra.mxu0 0.0
    %866 = vmatprep.subr.mxu0 0.0
    %867 = vmatpush1.msra.mxu0 0.0
    %868 = vmatprep.subr.mxu0 0.0
    %869 = vmatpush1.msra.mxu0 0.0
    %870 = vmatprep.subr.mxu0 0.0
    %871 = vmatpush1.msra.mxu0 0.0
    %872 = vmatprep.subr.mxu0 0.0
    %873 = vmatpush1.msra.mxu0 0.0
    %874 = vmatprep.subr.mxu0 0.0
    %875 = vmatpush1.msra.mxu0 0.0
    %876 = vmatprep.subr.mxu0 0.0
    %877 = vmatpush1.msra.mxu0 0.0
    %878 = vmatprep.subr.mxu0 0.0
    %879 = vmatpush1.msra.mxu0 0.0
    %880 = vmatprep.subr.mxu0 0.0
    %881 = vmatpush1.msra.mxu0 0.0
    %882 = vmatprep.subr.mxu0 0.0
    %883 = vmatpush1.msra.mxu0 0.0
    %884 = vmatprep.subr.mxu0 0.0
    %885 = vmatpush1.msra.mxu0 0.0
    %886 = vmatprep.subr.mxu0 0.0
    %887 = vmatpush1.msra.mxu0 0.0
    %888 = vmatprep.subr.mxu0 0.0
    %889 = vmatpush1.msra.mxu0 0.0
    %890 = vmatprep.subr.mxu0 0.0
    %891 = vmatpush1.msra.mxu0 0.0
    %892 = vmatprep.subr.mxu0 0.0
    %893 = vmatpush1.msra.mxu0 0.0
    %894 = vmatprep.subr.mxu0 0.0
    %895 = vmatpush1.msra.mxu0 0.0
    %896 = vmatprep.subr.mxu0 0.0
    %897 = vmatpush1.msra.mxu0 0.0
    %898 = vmatprep.subr.mxu0 0.0
    %899 = vmatpush1.msra.mxu0 0.0
    %900 = vmatprep.subr.mxu0 0.0
    %901 = vmatpush1.msra.mxu0 0.0
    %902 = vmatprep.subr.mxu0 0.0
    %903 = vmatpush1.msra.mxu0 0.0
    %904 = vmatprep.subr.mxu0 0.0
    %905 = vmatpush1.msra.mxu0 0.0
    %906 = vmatprep.subr.mxu0 0.0
    %907 = vmatpush1.msra.mxu0 0.0
    %908 = vmatprep.subr.mxu0 0.0
    %909 = vmatpush1.msra.mxu0 0.0
    %910 = vmatprep.subr.mxu0 0.0
    %911 = vmatpush1.msra.mxu0 0.0
    %912 = vmatprep.subr.mxu0 0.0
    %913 = vmatpush1.msra.mxu0 0.0
    %914 = vmatprep.mubr.f32.mxu0 0.0
    %915 = vmatmul.mubr.f32.gmra.mrb[0].mxu0 %v848
    %v916 = vpop.f32.mrb[0].mxu0
    %v917 = vadd.f32 %v603, %v916
    %v918 = vpop.f32.mrb[0].mxu0
    %919 = vdwg.mxu0
    %v921 = vsel %vm153, %v844, 0
    %923 = vmatprep.subr.mxu0 0.0
    %924 = vmatpush1.xpose.msra.mxu0 %v275
    %925 = vmatprep.subr.mxu0 0.0
    %926 = vmatpush1.xpose.msra.mxu0 0.0
    %927 = vmatprep.subr.mxu0 0.0
    %928 = vmatpush1.xpose.msra.mxu0 0.0
    %929 = vmatprep.subr.mxu0 0.0
    %930 = vmatpush1.xpose.msra.mxu0 0.0
    %931 = vmatprep.subr.mxu0 0.0
    %932 = vmatpush1.xpose.msra.mxu0 0.0
    %933 = vmatprep.subr.mxu0 0.0
    %934 = vmatpush1.xpose.msra.mxu0 0.0
    %935 = vmatprep.subr.mxu0 0.0
    %936 = vmatpush1.xpose.msra.mxu0 0.0
    %937 = vmatprep.subr.mxu0 0.0
    %938 = vmatpush1.xpose.msra.mxu0 0.0
    %939 = vmatprep.subr.mxu0 0.0
    %940 = vmatpush1.xpose.msra.mxu0 0.0
    %941 = vmatprep.subr.mxu0 0.0
    %942 = vmatpush1.xpose.msra.mxu0 0.0
    %943 = vmatprep.subr.mxu0 0.0
    %944 = vmatpush1.xpose.msra.mxu0 0.0
    %945 = vmatprep.subr.mxu0 0.0
    %946 = vmatpush1.xpose.msra.mxu0 0.0
    %947 = vmatprep.subr.mxu0 0.0
    %948 = vmatpush1.xpose.msra.mxu0 0.0
    %949 = vmatprep.subr.mxu0 0.0
    %950 = vmatpush1.xpose.msra.mxu0 0.0
    %951 = vmatprep.subr.mxu0 0.0
    %952 = vmatpush1.xpose.msra.mxu0 0.0
    %953 = vmatprep.subr.mxu0 0.0
    %954 = vmatpush1.xpose.msra.mxu0 0.0
    %955 = vmatprep.subr.mxu0 0.0
    %956 = vmatpush1.xpose.msra.mxu0 0.0
    %957 = vmatprep.subr.mxu0 0.0
    %958 = vmatpush1.xpose.msra.mxu0 0.0
    %959 = vmatprep.subr.mxu0 0.0
    %960 = vmatpush1.xpose.msra.mxu0 0.0
    %961 = vmatprep.subr.mxu0 0.0
    %962 = vmatpush1.xpose.msra.mxu0 0.0
    %963 = vmatprep.subr.mxu0 0.0
    %964 = vmatpush1.xpose.msra.mxu0 0.0
    %965 = vmatprep.subr.mxu0 0.0
    %966 = vmatpush1.xpose.msra.mxu0 0.0
    %967 = vmatprep.subr.mxu0 0.0
    %968 = vmatpush1.xpose.msra.mxu0 0.0
    %969 = vmatprep.subr.mxu0 0.0
    %970 = vmatpush1.xpose.msra.mxu0 0.0
    %971 = vmatprep.subr.mxu0 0.0
    %972 = vmatpush1.xpose.msra.mxu0 0.0
    %973 = vmatprep.subr.mxu0 0.0
    %974 = vmatpush1.xpose.msra.mxu0 0.0
    %975 = vmatprep.subr.mxu0 0.0
    %976 = vmatpush1.xpose.msra.mxu0 0.0
    %977 = vmatprep.subr.mxu0 0.0
    %978 = vmatpush1.xpose.msra.mxu0 0.0
    %979 = vmatprep.subr.mxu0 0.0
    %980 = vmatpush1.xpose.msra.mxu0 0.0
    %981 = vmatprep.subr.mxu0 0.0
    %982 = vmatpush1.xpose.msra.mxu0 0.0
    %983 = vmatprep.subr.mxu0 0.0
    %984 = vmatpush1.xpose.msra.mxu0 0.0
    %985 = vmatprep.subr.mxu0 0.0
    %986 = vmatpush1.xpose.msra.mxu0 0.0
    %987 = vmatprep.mubr.f32.mxu0 0.0
    %988 = vmatmul.mubr.f32.gmra.mrb[0].mxu0 %v921
    %v989 = vpop.f32.mrb[0].mxu0
    %v990 = vadd.f32 0.0, %v989
    %v991 = vpop.f32.mrb[0].mxu0
    %992 = vdwg.mxu0
    %v994 = vsel %vm153, %v917, 0
    %996 = vmatprep.subr.mxu0 0.0
    %997 = vmatpush1.xpose.msra.mxu0 %v356
    %998 = vmatprep.subr.mxu0 0.0
    %999 = vmatpush1.xpose.msra.mxu0 0.0
    %1000 = vmatprep.subr.mxu0 0.0
    %1001 = vmatpush1.xpose.msra.mxu0 0.0
    %1002 = vmatprep.subr.mxu0 0.0
    %1003 = vmatpush1.xpose.msra.mxu0 0.0
    %1004 = vmatprep.subr.mxu0 0.0
    %1005 = vmatpush1.xpose.msra.mxu0 0.0
    %1006 = vmatprep.subr.mxu0 0.0
    %1007 = vmatpush1.xpose.msra.mxu0 0.0
    %1008 = vmatprep.subr.mxu0 0.0
    %1009 = vmatpush1.xpose.msra.mxu0 0.0
    %1010 = vmatprep.subr.mxu0 0.0
    %1011 = vmatpush1.xpose.msra.mxu0 0.0
    %1012 = vmatprep.subr.mxu0 0.0
    %1013 = vmatpush1.xpose.msra.mxu0 0.0
    %1014 = vmatprep.subr.mxu0 0.0
    %1015 = vmatpush1.xpose.msra.mxu0 0.0
    %1016 = vmatprep.subr.mxu0 0.0
    %1017 = vmatpush1.xpose.msra.mxu0 0.0
    %1018 = vmatprep.subr.mxu0 0.0
    %1019 = vmatpush1.xpose.msra.mxu0 0.0
    %1020 = vmatprep.subr.mxu0 0.0
    %1021 = vmatpush1.xpose.msra.mxu0 0.0
    %1022 = vmatprep.subr.mxu0 0.0
    %1023 = vmatpush1.xpose.msra.mxu0 0.0
    %1024 = vmatprep.subr.mxu0 0.0
    %1025 = vmatpush1.xpose.msra.mxu0 0.0
    %1026 = vmatprep.subr.mxu0 0.0
    %1027 = vmatpush1.xpose.msra.mxu0 0.0
    %1028 = vmatprep.subr.mxu0 0.0
    %1029 = vmatpush1.xpose.msra.mxu0 0.0
    %1030 = vmatprep.subr.mxu0 0.0
    %1031 = vmatpush1.xpose.msra.mxu0 0.0
    %1032 = vmatprep.subr.mxu0 0.0
    %1033 = vmatpush1.xpose.msra.mxu0 0.0
    %1034 = vmatprep.subr.mxu0 0.0
    %1035 = vmatpush1.xpose.msra.mxu0 0.0
    %1036 = vmatprep.subr.mxu0 0.0
    %1037 = vmatpush1.xpose.msra.mxu0 0.0
    %1038 = vmatprep.subr.mxu0 0.0
    %1039 = vmatpush1.xpose.msra.mxu0 0.0
    %1040 = vmatprep.subr.mxu0 0.0
    %1041 = vmatpush1.xpose.msra.mxu0 0.0
    %1042 = vmatprep.subr.mxu0 0.0
    %1043 = vmatpush1.xpose.msra.mxu0 0.0
    %1044 = vmatprep.subr.mxu0 0.0
    %1045 = vmatpush1.xpose.msra.mxu0 0.0
    %1046 = vmatprep.subr.mxu0 0.0
    %1047 = vmatpush1.xpose.msra.mxu0 0.0
    %1048 = vmatprep.subr.mxu0 0.0
    %1049 = vmatpush1.xpose.msra.mxu0 0.0
    %1050 = vmatprep.subr.mxu0 0.0
    %1051 = vmatpush1.xpose.msra.mxu0 0.0
    %1052 = vmatprep.subr.mxu0 0.0
    %1053 = vmatpush1.xpose.msra.mxu0 0.0
    %1054 = vmatprep.subr.mxu0 0.0
    %1055 = vmatpush1.xpose.msra.mxu0 0.0
    %1056 = vmatprep.subr.mxu0 0.0
    %1057 = vmatpush1.xpose.msra.mxu0 0.0
    %1058 = vmatprep.subr.mxu0 0.0
    %1059 = vmatpush1.xpose.msra.mxu0 0.0
    %1060 = vmatprep.mubr.f32.mxu0 0.0
    %1061 = vmatmul.mubr.f32.gmra.mrb[0].mxu0 %v994
    %v1062 = vpop.f32.mrb[0].mxu0
    %v1063 = vadd.f32 0.0, %v1062
    %v1064 = vpop.f32.mrb[0].mxu0
    %1065 = vdwg.mxu0
    %v1066 = vsel %vm428, %v990, -inf
    %1067 = vmax.xlane.f32.xlu0 %v1066
    %v1068 = vpop.xlane.xlu0 %1067
    %v1069 = vsel %vm428, %v1063, -inf
    %1070 = vmax.xlane.f32.xlu0 %v1069
    %v1071 = vpop.xlane.xlu0 %1070
    %v1072 = vsub.f32 %v990, %v1068
    %v1073 = vsub.f32 %v1063, %v1071
    %v1074 = vmul.f32 %v1072, 1.442695
    %v1075 = vpow.pop %v1074
    %v1076 = vmul.f32 %v1073, 1.442695
    %v1077 = vpow.pop %v1076
    %v1078 = vsel %vm428, %v1075, 0.0
    %1079 = vadd.xlane.f32.xlu0 %v1078
    %v1080 = vpop.xlane.xlu0 %1079
    %v1081 = vsel %vm428, %v1077, 0.0
    %1082 = vadd.xlane.f32.xlu0 %v1081
    %v1083 = vpop.xlane.xlu0 %1082
    %v1084 = vrcp.pop %v1080
    %v1085 = vrcp.pop %v1083
    %v1086 = vmul.f32 %v1075, %v1084
    %v1087 = vmul.f32 %v1077, %v1085
    %v1089 = vsel %vm455, %v1086, 0
    %1091 = vmatprep.subr.mxu0 0.0
    %1092 = vmatpush1.msra.mxu0 %v452
    %1093 = vmatprep.subr.mxu0 0.0
    %1094 = vmatpush1.msra.mxu0 0.0
    %1095 = vmatprep.subr.mxu0 0.0
    %1096 = vmatpush1.msra.mxu0 0.0
    %1097 = vmatprep.subr.mxu0 0.0
    %1098 = vmatpush1.msra.mxu0 0.0
    %1099 = vmatprep.subr.mxu0 0.0
    %1100 = vmatpush1.msra.mxu0 0.0
    %1101 = vmatprep.subr.mxu0 0.0
    %1102 = vmatpush1.msra.mxu0 0.0
    %1103 = vmatprep.subr.mxu0 0.0
    %1104 = vmatpush1.msra.mxu0 0.0
    %1105 = vmatprep.subr.mxu0 0.0
    %1106 = vmatpush1.msra.mxu0 0.0
    %1107 = vmatprep.subr.mxu0 0.0
    %1108 = vmatpush1.msra.mxu0 0.0
    %1109 = vmatprep.subr.mxu0 0.0
    %1110 = vmatpush1.msra.mxu0 0.0
    %1111 = vmatprep.subr.mxu0 0.0
    %1112 = vmatpush1.msra.mxu0 0.0
    %1113 = vmatprep.subr.mxu0 0.0
    %1114 = vmatpush1.msra.mxu0 0.0
    %1115 = vmatprep.subr.mxu0 0.0
    %1116 = vmatpush1.msra.mxu0 0.0
    %1117 = vmatprep.subr.mxu0 0.0
    %1118 = vmatpush1.msra.mxu0 0.0
    %1119 = vmatprep.subr.mxu0 0.0
    %1120 = vmatpush1.msra.mxu0 0.0
    %1121 = vmatprep.subr.mxu0 0.0
    %1122 = vmatpush1.msra.mxu0 0.0
    %1123 = vmatprep.subr.mxu0 0.0
    %1124 = vmatpush1.msra.mxu0 0.0
    %1125 = vmatprep.subr.mxu0 0.0
    %1126 = vmatpush1.msra.mxu0 0.0
    %1127 = vmatprep.subr.mxu0 0.0
    %1128 = vmatpush1.msra.mxu0 0.0
    %1129 = vmatprep.subr.mxu0 0.0
    %1130 = vmatpush1.msra.mxu0 0.0
    %1131 = vmatprep.subr.mxu0 0.0
    %1132 = vmatpush1.msra.mxu0 0.0
    %1133 = vmatprep.subr.mxu0 0.0
    %1134 = vmatpush1.msra.mxu0 0.0
    %1135 = vmatprep.subr.mxu0 0.0
    %1136 = vmatpush1.msra.mxu0 0.0
    %1137 = vmatprep.subr.mxu0 0.0
    %1138 = vmatpush1.msra.mxu0 0.0
    %1139 = vmatprep.subr.mxu0 0.0
    %1140 = vmatpush1.msra.mxu0 0.0
    %1141 = vmatprep.subr.mxu0 0.0
    %1142 = vmatpush1.msra.mxu0 0.0
    %1143 = vmatprep.subr.mxu0 0.0
    %1144 = vmatpush1.msra.mxu0 0.0
    %1145 = vmatprep.subr.mxu0 0.0
    %1146 = vmatpush1.msra.mxu0 0.0
    %1147 = vmatprep.subr.mxu0 0.0
    %1148 = vmatpush1.msra.mxu0 0.0
    %1149 = vmatprep.subr.mxu0 0.0
    %1150 = vmatpush1.msra.mxu0 0.0
    %1151 = vmatprep.subr.mxu0 0.0
    %1152 = vmatpush1.msra.mxu0 0.0
    %1153 = vmatprep.subr.mxu0 0.0
    %1154 = vmatpush1.msra.mxu0 0.0
    %1155 = vmatprep.mubr.f32.mxu0 0.0
    %1156 = vmatmul.mubr.f32.gmra.mrb[0].mxu0 %v1089
    %v1157 = vpop.f32.mrb[0].mxu0
    %v1158 = vadd.f32 %v844, %v1157
    %v1159 = vpop.f32.mrb[0].mxu0
    %1160 = vdwg.mxu0
    %v1162 = vsel %vm455, %v1087, 0
    %1164 = vmatprep.subr.mxu0 0.0
    %1165 = vmatpush1.msra.mxu0 %v530
    %1166 = vmatprep.subr.mxu0 0.0
    %1167 = vmatpush1.msra.mxu0 0.0
    %1168 = vmatprep.subr.mxu0 0.0
    %1169 = vmatpush1.msra.mxu0 0.0
    %1170 = vmatprep.subr.mxu0 0.0
    %1171 = vmatpush1.msra.mxu0 0.0
    %1172 = vmatprep.subr.mxu0 0.0
    %1173 = vmatpush1.msra.mxu0 0.0
    %1174 = vmatprep.subr.mxu0 0.0
    %1175 = vmatpush1.msra.mxu0 0.0
    %1176 = vmatprep.subr.mxu0 0.0
    %1177 = vmatpush1.msra.mxu0 0.0
    %1178 = vmatprep.subr.mxu0 0.0
    %1179 = vmatpush1.msra.mxu0 0.0
    %1180 = vmatprep.subr.mxu0 0.0
    %1181 = vmatpush1.msra.mxu0 0.0
    %1182 = vmatprep.subr.mxu0 0.0
    %1183 = vmatpush1.msra.mxu0 0.0
    %1184 = vmatprep.subr.mxu0 0.0
    %1185 = vmatpush1.msra.mxu0 0.0
    %1186 = vmatprep.subr.mxu0 0.0
    %1187 = vmatpush1.msra.mxu0 0.0
    %1188 = vmatprep.subr.mxu0 0.0
    %1189 = vmatpush1.msra.mxu0 0.0
    %1190 = vmatprep.subr.mxu0 0.0
    %1191 = vmatpush1.msra.mxu0 0.0
    %1192 = vmatprep.subr.mxu0 0.0
    %1193 = vmatpush1.msra.mxu0 0.0
    %1194 = vmatprep.subr.mxu0 0.0
    %1195 = vmatpush1.msra.mxu0 0.0
    %1196 = vmatprep.subr.mxu0 0.0
    %1197 = vmatpush1.msra.mxu0 0.0
    %1198 = vmatprep.subr.mxu0 0.0
    %1199 = vmatpush1.msra.mxu0 0.0
    %1200 = vmatprep.subr.mxu0 0.0
    %1201 = vmatpush1.msra.mxu0 0.0
    %1202 = vmatprep.subr.mxu0 0.0
    %1203 = vmatpush1.msra.mxu0 0.0
    %1204 = vmatprep.subr.mxu0 0.0
    %1205 = vmatpush1.msra.mxu0 0.0
    %1206 = vmatprep.subr.mxu0 0.0
    %1207 = vmatpush1.msra.mxu0 0.0
    %1208 = vmatprep.subr.mxu0 0.0
    %1209 = vmatpush1.msra.mxu0 0.0
    %1210 = vmatprep.subr.mxu0 0.0
    %1211 = vmatpush1.msra.mxu0 0.0
    %1212 = vmatprep.subr.mxu0 0.0
    %1213 = vmatpush1.msra.mxu0 0.0
    %1214 = vmatprep.subr.mxu0 0.0
    %1215 = vmatpush1.msra.mxu0 0.0
    %1216 = vmatprep.subr.mxu0 0.0
    %1217 = vmatpush1.msra.mxu0 0.0
    %1218 = vmatprep.subr.mxu0 0.0
    %1219 = vmatpush1.msra.mxu0 0.0
    %1220 = vmatprep.subr.mxu0 0.0
    %1221 = vmatpush1.msra.mxu0 0.0
    %1222 = vmatprep.subr.mxu0 0.0
    %1223 = vmatpush1.msra.mxu0 0.0
    %1224 = vmatprep.subr.mxu0 0.0
    %1225 = vmatpush1.msra.mxu0 0.0
    %1226 = vmatprep.subr.mxu0 0.0
    %1227 = vmatpush1.msra.mxu0 0.0
    %1228 = vmatprep.mubr.f32.mxu0 0.0
    %1229 = vmatmul.mubr.f32.gmra.mrb[0].mxu0 %v1162
    %v1230 = vpop.f32.mrb[0].mxu0
    %v1231 = vadd.f32 %v917, %v1230
    %v1232 = vpop.f32.mrb[0].mxu0
    %1233 = vdwg.mxu0
    %v1234 = vld [vmem:[%s2] sm:$0xff]
    %v1235 = vld [vmem:[%s2 + $0x8] sm:$0xff]
    %v1236 = vld [vmem:[%s2 + $0x10] sm:$0xff]
    %v1237 = vld [vmem:[%s2 + $0x18] sm:$0xff]
    %v1238 = vld [vmem:[%s3] sm:$0x1]
    %v1240 = vlaneseq
    %v1241 = vshrl.u32 %v1240, 7
    %v1242 = vsub.s32 0, %v1241
    %v1243 = vrot.slane %v1238, %v1242
    %v1247 = vrot.slane %v1231, 7
    %vm1248 = vcmask 1041409
    %v1249 = vsel %vm1248, %v1247, %v1158
    %v1250 = vsel %vm153, %v1249, 0
    %v1253 = vsel %vm153, %v1234, 0
    %v1256 = vsel %vm153, %v1235, 0
    %v1259 = vsel %vm153, %v1236, 0
    %v1262 = vsel %vm153, %v1237, 0
    %1264 = vmatprep.subr.mxu0 0.0
    %1265 = vmatpush1.xpose.msra.mxu0 %v1253
    %1266 = vmatprep.subr.mxu0 0.0
    %1267 = vmatpush1.xpose.msra.mxu0 %v1256
    %1268 = vmatprep.subr.mxu0 0.0
    %1269 = vmatpush1.xpose.msra.mxu0 %v1259
    %1270 = vmatprep.subr.mxu0 0.0
    %1271 = vmatpush1.xpose.msra.mxu0 %v1262
    %1272 = vmatprep.subr.mxu0 0.0
    %1273 = vmatpush1.xpose.msra.mxu0 0.0
    %1274 = vmatprep.subr.mxu0 0.0
    %1275 = vmatpush1.xpose.msra.mxu0 0.0
    %1276 = vmatprep.subr.mxu0 0.0
    %1277 = vmatpush1.xpose.msra.mxu0 0.0
    %1278 = vmatprep.subr.mxu0 0.0
    %1279 = vmatpush1.xpose.msra.mxu0 0.0
    %1280 = vmatprep.subr.mxu0 0.0
    %1281 = vmatpush1.xpose.msra.mxu0 0.0
    %1282 = vmatprep.subr.mxu0 0.0
    %1283 = vmatpush1.xpose.msra.mxu0 0.0
    %1284 = vmatprep.subr.mxu0 0.0
    %1285 = vmatpush1.xpose.msra.mxu0 0.0
    %1286 = vmatprep.subr.mxu0 0.0
    %1287 = vmatpush1.xpose.msra.mxu0 0.0
    %1288 = vmatprep.subr.mxu0 0.0
    %1289 = vmatpush1.xpose.msra.mxu0 0.0
    %1290 = vmatprep.subr.mxu0 0.0
    %1291 = vmatpush1.xpose.msra.mxu0 0.0
    %1292 = vmatprep.subr.mxu0 0.0
    %1293 = vmatpush1.xpose.msra.mxu0 0.0
    %1294 = vmatprep.subr.mxu0 0.0
    %1295 = vmatpush1.xpose.msra.mxu0 0.0
    %1296 = vmatprep.subr.mxu0 0.0
    %1297 = vmatpush1.xpose.msra.mxu0 0.0
    %1298 = vmatprep.subr.mxu0 0.0
    %1299 = vmatpush1.xpose.msra.mxu0 0.0
    %1300 = vmatprep.subr.mxu0 0.0
    %1301 = vmatpush1.xpose.msra.mxu0 0.0
    %1302 = vmatprep.subr.mxu0 0.0
    %1303 = vmatpush1.xpose.msra.mxu0 0.0
    %1304 = vmatprep.subr.mxu0 0.0
    %1305 = vmatpush1.xpose.msra.mxu0 0.0
    %1306 = vmatprep.subr.mxu0 0.0
    %1307 = vmatpush1.xpose.msra.mxu0 0.0
    %1308 = vmatprep.subr.mxu0 0.0
    %1309 = vmatpush1.xpose.msra.mxu0 0.0
    %1310 = vmatprep.subr.mxu0 0.0
    %1311 = vmatpush1.xpose.msra.mxu0 0.0
    %1312 = vmatprep.subr.mxu0 0.0
    %1313 = vmatpush1.xpose.msra.mxu0 0.0
    %1314 = vmatprep.subr.mxu0 0.0
    %1315 = vmatpush1.xpose.msra.mxu0 0.0
    %1316 = vmatprep.subr.mxu0 0.0
    %1317 = vmatpush1.xpose.msra.mxu0 0.0
    %1318 = vmatprep.subr.mxu0 0.0
    %1319 = vmatpush1.xpose.msra.mxu0 0.0
    %1320 = vmatprep.subr.mxu0 0.0
    %1321 = vmatpush1.xpose.msra.mxu0 0.0
    %1322 = vmatprep.subr.mxu0 0.0
    %1323 = vmatpush1.xpose.msra.mxu0 0.0
    %1324 = vmatprep.subr.mxu0 0.0
    %1325 = vmatpush1.xpose.msra.mxu0 0.0
    %1326 = vmatprep.subr.mxu0 0.0
    %1327 = vmatpush1.xpose.msra.mxu0 0.0
    %1328 = vmatprep.mubr.f32.mxu0 0.0
    %1329 = vmatmul.mubr.f32.gmra.mrb[0].mxu0 %v1250
    %v1330 = vpop.f32.mrb[0].mxu0
    %v1331 = vadd.f32 %v1243, %v1330
    %v1332 = vpop.f32.mrb[0].mxu0
    %1333 = vdwg.mxu0
    %vm1334 = vcmask 254976
    %1335 = vst.msk [vmem:[#allocation2] sm:$0x3] %vm1334, %v1331
    // Predicated region
    $region18: #{emn_forward.1} parent=1 // pred_check
      _
    $region19: #{emn_forward.1} parent=1 // pred_check_branch
      %1337 = sbr.rel (0) target = $region21
    $region20: #{emn_forward.1} parent=1 // pred_region
      %s1339 = ssub.s32 32, 32
      %1340 = vsyncadd [#allocation3], %s1339
      %s1342 = sshll.u32 [#allocation2], 4
      %s1343 = int_to_ptr.vmem [resolvable:$true] %s1342
      %1345 = dma.vmem_to_hbm [thread:$0]  %s1343, 32, %s4, [#allocation3]
    $region21: #{emn_forward.1} parent=1 // pred_fallthru
      _
    // Predicated region
    $region22: #{emn_forward.1} parent=1 // pred_check
      _
    $region23: #{emn_forward.1} parent=1 // pred_check_branch
      %1347 = sbr.rel (0) target = $region25
    $region24: #{emn_forward.1} parent=1 // pred_region
      %1348 = dma.done [#allocation3], 32
    $region25: #{emn_forward.1} parent=1 // pred_fallthru
      _
    %1349 = vsyncpa [#allocation3], 1

</llo_original>
